<compile_context>
chip_gen: v5e
topology: v5e:2x2
jax: 0.10.0
libtpu: 0.0.40
codegen_flags: <defaults>
</compile_context>

<pallas_src>
import functools
import math

import jax
import jax.numpy as jnp
from jax.experimental import pallas as pl
from jax.experimental.pallas import tpu as pltpu


def _round_up(x: int, m: int) -> int:
    return ((x + m - 1) // m) * m


def _sinusoid_kernel(time_ref, const_ref, out_ref, *, k: int):
    # time_ref : (tm, k)   f32 — k timesteps packed per output row
    # const_ref: (k+1, W)  f32 — rows 0..k-1: frequency pattern masked to its
    #                            dim-wide lane group; row k: phase (0 | pi/2)
    #                            tiled per group.
    # out_ref  : (tm, W)   out_dtype  (W = k*dim, lane-dense when dim < 128)
    t = time_ref[...]                                  # (tm, k)
    acc = t[:, 0:1] * const_ref[0:1, :]                # (tm, W) via broadcast
    for g in range(1, k):                              # static unroll, VPU only
        acc = acc + t[:, g:g + 1] * const_ref[g:g + 1, :]
    args = acc + const_ref[k:k + 1, :]
    # sin(x) on the first half of each group, sin(x + pi/2) == cos(x) on the
    # second half -> single full-width EUP sin, one dense store, no concat.
    out_ref[...] = jnp.sin(args).astype(out_ref.dtype)


def sinusoidal_position_embeddings(
    time: jax.Array,
    dim: int,
    *,
    block_rows: int = 1024,
    out_dtype=jnp.float32,          # pass jnp.bfloat16 when the consumer accepts it
    vmem_budget_bytes: int = 12 * 1024 * 1024,
) -> jax.Array:
    """time: (B,) float timesteps -> (B, dim) embeddings [sin | cos]."""
    assert dim % 2 == 0, "dim must be even"
    assert dim >= 4, "dim must be >= 4 (half_dim - 1 would be zero otherwise)"
    half = dim // 2
    B = time.shape[0]
    out_bytes = jnp.dtype(out_dtype).itemsize

    # ---- lane packing factor (dense 128-lane stores for small dims) ---------
    if dim < 128 and 128 % dim == 0:
        k = 128 // dim
    else:
        k = 1
    W = k * dim

    # ---- trace-time constants (hoisted out of the kernel) -------------------
    neg_scale = -(math.log(10000.0) / (half - 1))
    freqs = jnp.exp(jnp.arange(half, dtype=jnp.float32) * neg_scale)   # (half,)
    freq_rep = jnp.concatenate([freqs, freqs])                         # (dim,)
    phase = jnp.concatenate(
        [jnp.zeros((half,), jnp.float32),
         jnp.full((half,), math.pi / 2.0, jnp.float32)])               # (dim,)
    # row g has freq_rep in lanes [g*dim, (g+1)*dim), zeros elsewhere.
    freq_rows = (jnp.eye(k, dtype=jnp.float32)[:, :, None]
                 * freq_rep[None, None, :]).reshape(k, W)               # (k, W)
    phase_row = jnp.tile(phase, (k,)).reshape(1, W)                     # (1, W)
    const = jnp.concatenate([freq_rows, phase_row], axis=0)             # (k+1, W)

    # ---- pack k timesteps per packed output row ------------------------------
    B_pad = _round_up(B, k)                 # only to a multiple of k (k=1 -> no pad)
    t32 = time.astype(jnp.float32)
    if B_pad != B:
        t32 = jnp.pad(t32, (0, B_pad - B))
    B_pack = B_pad // k
    time_packed = t32.reshape(B_pack, k)

    # ---- batch tile: VMEM-budget aware, >=2 grid steps when possible (v7x) ---
    # Working set ~= 2*tm*W*out_bytes (double-buffered output)
    #              + ~2*tm*512 B (lane-sparse (tm,k) time tile layout) + const.
    per_row = 2 * W * out_bytes + 2 * 512
    tm_budget = max(8, (vmem_budget_bytes // per_row) // 8 * 8)
    tm_split = _round_up(max(1, (B_pack + 1) // 2), 8)   # grid >= 2 so both v7x TCs run
    tm = max(8, (min(block_rows, tm_budget, tm_split) // 8) * 8)

    grid = (pl.cdiv(B_pack, tm),)           # partial last block masked by Pallas

    out_packed = pl.pallas_call(
        functools.partial(_sinusoid_kernel, k=k),
        out_shape=jax.ShapeDtypeStruct((B_pack, W), out_dtype),
        grid=grid,
        in_specs=[
            pl.BlockSpec((tm, k), lambda i: (i, 0)),        # packed timesteps
            pl.BlockSpec((k + 1, W), lambda i: (0, 0)),     # pinned constants
        ],
        out_specs=pl.BlockSpec((tm, W), lambda i: (i, 0)),
        compiler_params=pltpu.CompilerParams(
            dimension_semantics=("parallel",),              # 2 TCs on v7x
        ),
    )(time_packed, const)

    # Free reshape back to (B_pad, dim); slice only when B wasn't a multiple of k.
    out = out_packed.reshape(B_pad, dim)
    if B_pad != B:
        out = out[:B]
    return out


def _reference(time: jax.Array, dim: int) -> jax.Array:
    half = dim // 2
    emb = math.log(10000.0) / (half - 1)
    freqs = jnp.exp(jnp.arange(half, dtype=jnp.float32) * -emb)
    args = time.astype(jnp.float32)[:, None] * freqs[None, :]
    return jnp.concatenate([jnp.sin(args), jnp.cos(args)], axis=-1)


if __name__ == "__main__":
    key = jax.random.PRNGKey(0)

    # --- case 1: small batch, dim < 128 (lane-packed path, k=4) ---------------
    B, DIM = 8, 32
    t1 = jax.random.uniform(key, (B,), jnp.float32, minval=0.0, maxval=1000.0)
    out1 = jax.block_until_ready(sinusoidal_position_embeddings(t1, DIM))
    ref1 = _reference(t1, DIM)
    assert out1.shape == (B, DIM), out1.shape
    assert jnp.allclose(out1, ref1, atol=5e-4, rtol=1e-4), (
        f"max abs err = {jnp.max(jnp.abs(out1 - ref1))}")

    # --- case 2: ragged batch, tiny dim (packed, pad-to-k + slice, k=16) ------
    B2, DIM2 = 5, 8
    t2 = jax.random.uniform(jax.random.PRNGKey(1), (B2,), jnp.float32,
                            minval=0.0, maxval=1000.0)
    out2 = jax.block_until_ready(sinusoidal_position_embeddings(t2, DIM2))
    ref2 = _reference(t2, DIM2)
    assert out2.shape == (B2, DIM2), out2.shape
    assert jnp.allclose(out2, ref2, atol=5e-4, rtol=1e-4), (
        f"max abs err = {jnp.max(jnp.abs(out2 - ref2))}")

    # --- case 3: ragged batch, dim >= 128, bf16 output (unpacked path, grid=2,
    #     partial last block, no explicit pad / trailing slice) ----------------
    B3, DIM3 = 13, 256
    t3 = jax.random.uniform(jax.random.PRNGKey(2), (B3,), jnp.float32,
                            minval=0.0, maxval=1000.0)
    out3 = jax.block_until_ready(
        sinusoidal_position_embeddings(t3, DIM3, out_dtype=jnp.bfloat16))
    ref3 = _reference(t3, DIM3)
    assert out3.shape == (B3, DIM3), out3.shape
    assert out3.dtype == jnp.bfloat16
    assert jnp.allclose(out3.astype(jnp.float32), ref3, atol=1e-2, rtol=1e-2), (
        f"max abs err = {jnp.max(jnp.abs(out3.astype(jnp.float32) - ref3))}")

    print("KERNEL_OK")
</pallas_src>

<mosaic_0001>
module attributes {stable_mosaic.version = 11 : i64} {
  func.func @_sinusoid_kernel(%arg0: i32, %arg1: memref<8x4xf32, #tpu.memory_space<vmem>>, %arg2: memref<5x128xf32, #tpu.memory_space<vmem>>, %arg3: memref<8x128xf32, #tpu.memory_space<vmem>>) attributes {dimension_semantics = [#tpu.dimension_semantics<parallel>], iteration_bounds = array<i64: 1>, scalar_prefetch = 0 : i64, scratch_operands = 0 : i64, tpu.core_type = #tpu.core_type<tc>, window_params = [{transform_indices = @transform_0, window_bounds = array<i64: 8, 4>}, {pipeline_mode = #tpu.pipeline_mode<synchronous>, transform_indices = @transform_1, window_bounds = array<i64: 5, 128>}, {transform_indices = @transform_2, window_bounds = array<i64: 8, 128>}]} {
    %c0 = arith.constant 0 : index
    %c0_0 = arith.constant 0 : index
    %0 = vector.load %arg1[%c0, %c0_0] : memref<8x4xf32, #tpu.memory_space<vmem>>, vector<8x4xf32>
    %1 = vector.extract_strided_slice %0 {offsets = [0, 0], sizes = [8, 1], strides = [1, 1]} : vector<8x4xf32> to vector<8x1xf32>
    %c0_1 = arith.constant 0 : index
    %c0_2 = arith.constant 0 : index
    %2 = vector.load %arg2[%c0_1, %c0_2] : memref<5x128xf32, #tpu.memory_space<vmem>>, vector<1x128xf32>
    %3 = vector.broadcast %1 : vector<8x1xf32> to vector<8x128xf32>
    %4 = vector.broadcast %2 : vector<1x128xf32> to vector<8x128xf32>
    %5 = arith.mulf %3, %4 : vector<8x128xf32>
    %6 = vector.extract_strided_slice %0 {offsets = [0, 1], sizes = [8, 1], strides = [1, 1]} : vector<8x4xf32> to vector<8x1xf32>
    %c1 = arith.constant 1 : index
    %c0_3 = arith.constant 0 : index
    %7 = vector.load %arg2[%c1, %c0_3] : memref<5x128xf32, #tpu.memory_space<vmem>>, vector<1x128xf32>
    %8 = vector.broadcast %6 : vector<8x1xf32> to vector<8x128xf32>
    %9 = vector.broadcast %7 : vector<1x128xf32> to vector<8x128xf32>
    %10 = arith.mulf %8, %9 : vector<8x128xf32>
    %11 = arith.addf %5, %10 : vector<8x128xf32>
    %12 = vector.extract_strided_slice %0 {offsets = [0, 2], sizes = [8, 1], strides = [1, 1]} : vector<8x4xf32> to vector<8x1xf32>
    %c2 = arith.constant 2 : index
    %c0_4 = arith.constant 0 : index
    %13 = vector.load %arg2[%c2, %c0_4] : memref<5x128xf32, #tpu.memory_space<vmem>>, vector<1x128xf32>
    %14 = vector.broadcast %12 : vector<8x1xf32> to vector<8x128xf32>
    %15 = vector.broadcast %13 : vector<1x128xf32> to vector<8x128xf32>
    %16 = arith.mulf %14, %15 : vector<8x128xf32>
    %17 = arith.addf %11, %16 : vector<8x128xf32>
    %18 = vector.extract_strided_slice %0 {offsets = [0, 3], sizes = [8, 1], strides = [1, 1]} : vector<8x4xf32> to vector<8x1xf32>
    %c3 = arith.constant 3 : index
    %c0_5 = arith.constant 0 : index
    %19 = vector.load %arg2[%c3, %c0_5] : memref<5x128xf32, #tpu.memory_space<vmem>>, vector<1x128xf32>
    %20 = vector.broadcast %18 : vector<8x1xf32> to vector<8x128xf32>
    %21 = vector.broadcast %19 : vector<1x128xf32> to vector<8x128xf32>
    %22 = arith.mulf %20, %21 : vector<8x128xf32>
    %23 = arith.addf %17, %22 : vector<8x128xf32>
    %c4 = arith.constant 4 : index
    %c0_6 = arith.constant 0 : index
    %24 = vector.load %arg2[%c4, %c0_6] : memref<5x128xf32, #tpu.memory_space<vmem>>, vector<1x128xf32>
    %25 = vector.broadcast %24 : vector<1x128xf32> to vector<8x128xf32>
    %26 = arith.addf %23, %25 : vector<8x128xf32>
    %27 = math.sin %26 : vector<8x128xf32>
    %c0_7 = arith.constant 0 : index
    %c0_8 = arith.constant 0 : index
    %28 = vector.load %arg3[%c0_7, %c0_8] : memref<8x128xf32, #tpu.memory_space<vmem>>, vector<8x128xf32>
    tpu.vector_store %arg3[%c0_7, %c0_8], %27 {strides = array<i32>} : memref<8x128xf32, #tpu.memory_space<vmem>>, vector<8x128xf32>,
    return
  }
  func.func @transform_0(%arg0: i32) -> (i32, i32) {
    %c0_i32 = arith.constant 0 : i32
    %c0_i32_0 = arith.constant 0 : i32
    return %arg0, %c0_i32 : i32, i32
  }
  func.func @transform_1(%arg0: i32) -> (i32, i32) {
    %c0_i32 = arith.constant 0 : i32
    %c0_i32_0 = arith.constant 0 : i32
    %c0_i32_1 = arith.constant 0 : i32
    return %c0_i32, %c0_i32_0 : i32, i32
  }
  func.func @transform_2(%arg0: i32) -> (i32, i32) {
    %c0_i32 = arith.constant 0 : i32
    %c0_i32_0 = arith.constant 0 : i32
    return %arg0, %c0_i32 : i32, i32
  }
}

</mosaic_0001>

<llo_original>
// kernel: tpu_custom_call.1
$region0: #{tpu_custom_call.1}
  #allocation0 [shape = 'u32[]', space=smem, size = 0x4, offset = 0x4, fixed_abs, tag = 'smem constant byte address 0x4 - core index']
  #allocation1 [shape = 'u32[72,128]{1,0:T(1,128)}', space=vmem, size = 0x9000, scoped, tag = 'internal scratch']
  %s0 = inlined_call_operand.hbm [shape: f32[2,4], index: 0, kind: input, shape index: {}]
  %s1 = inlined_call_operand.hbm [shape: f32[5,128], index: 1, kind: input, shape index: {}]
  %s2 = inlined_call_operand.hbm [shape: f32[2,128], index: 2, kind: output, shape index: {}]
  %s3 = sld [smem:[#allocation0]]
  $region26: #{tpu_custom_call.1} parent=0
    _
  %s5 = ssub.s32 1, %s3
  %s6 = scalar_select 0, %s5, %s3
  $region1: #{tpu_custom_call.1} parent=0
    #allocation2 [shape = 'u8[4096]{0}', space=vmem, size = 0x1000, scoped, tag = 'input window, operand 0, single buffered']
    #allocation3 [shape = 's32[1]{0}', space=sflag, size = 0x4, scoped, tag = 'scoped memory for tpu_custom_call.1']
    #allocation4 [shape = 's32[1]{0}', space=sflag, size = 0x4, scoped, tag = 'scoped memory for tpu_custom_call.1']
    #allocation5 [shape = 'u8[4096]{0}', space=vmem, size = 0x1000, scoped, tag = 'input window, operand 1, single buffered']
    #allocation6 [shape = 's32[1]{0}', space=sflag, size = 0x4, scoped, tag = 'scoped memory for tpu_custom_call.1']
    #allocation7 [shape = 'u8[4096]{0}', space=vmem, size = 0x1000, scoped, tag = 'output window, operand 0, single buffered']
    %7 = vsyncpa [#allocation3], 0
    %8 = vsyncpa [#allocation6], 0
    %9 = vsyncpa [#allocation4], 0
    // Predicated region
    $region2: #{tpu_custom_call.1} parent=1 // pred_check
      _
    $region3: #{tpu_custom_call.1} parent=1 // pred_check_branch
      %11 = sbr.rel (0) target = $region5
    $region4: #{tpu_custom_call.1} parent=1 // pred_region
      %13 = vsyncadd [#allocation3], 96
      %s14 = sshll.u32 %s0, 4
      %s15 = int_to_ptr.hbm [resolvable:$true] %s14
      %s16 = sshll.u32 [#allocation2], 4
      %s17 = int_to_ptr.vmem [resolvable:$true] %s16
      %22 = dma.hbm_to_vmem [thread:$0]  %s15, 32, %s17, [#allocation3], 32, 32, 2
    $region5: #{tpu_custom_call.1} parent=1 // pred_fallthru
      _
    // Predicated region
    $region6: #{tpu_custom_call.1} parent=1 // pred_check
      _
    $region7: #{tpu_custom_call.1} parent=1 // pred_check_branch
      %24 = sbr.rel (0) target = $region9
    $region8: #{tpu_custom_call.1} parent=1 // pred_region
      %26 = vsyncadd [#allocation6], 0
      %s28 = sshll.u32 %s1, 4
      %s29 = int_to_ptr.hbm [resolvable:$true] %s28
      %s30 = sshll.u32 [#allocation5], 4
      %s31 = int_to_ptr.vmem [resolvable:$true] %s30
      %33 = dma.hbm_to_vmem [thread:$0]  %s29, 128, %s31, [#allocation6]
    $region9: #{tpu_custom_call.1} parent=1 // pred_fallthru
      _
    // Predicated region
    $region10: #{tpu_custom_call.1} parent=1 // pred_check
      _
    $region11: #{tpu_custom_call.1} parent=1 // pred_check_branch
      %35 = sbr.rel (0) target = $region13
    $region12: #{tpu_custom_call.1} parent=1 // pred_region
      %37 = dma.done [#allocation3], 128
    $region13: #{tpu_custom_call.1} parent=1 // pred_fallthru
      _
    // Predicated region
    $region14: #{tpu_custom_call.1} parent=1 // pred_check
      _
    $region15: #{tpu_custom_call.1} parent=1 // pred_check_branch
      %39 = sbr.rel (0) target = $region17
    $region16: #{tpu_custom_call.1} parent=1 // pred_region
      %41 = dma.done [#allocation6], 128
    $region17: #{tpu_custom_call.1} parent=1 // pred_fallthru
      _
    %v42 = vld [vmem:[#allocation2] sm:$0xff]
    %v43 = vld [vmem:[#allocation5] sm:$0x1]
    %45 = vset.pattern.permute.xlu0 0
    %46 = vperm.xlu0 %45, %v42
    %v47 = vpop.permute.xlu0 %46
    %v49 = vperm.slane %v43, 0
    %v50 = vmul.f32 %v47, %v49
    %v51 = vld [vmem:[#allocation5 + $0x1] sm:$0x1]
    %52 = vset.pattern.permute.xlu0 1
    %53 = vperm.xlu0 %52, %v42
    %v54 = vpop.permute.xlu0 %53
    %v56 = vperm.slane %v51, 0
    %v57 = vmul.f32 %v54, %v56
    %v58 = vadd.f32 %v50, %v57
    %v59 = vld [vmem:[#allocation5 + $0x2] sm:$0x1]
    %60 = vset.pattern.permute.xlu0 2
    %61 = vperm.xlu0 %60, %v42
    %v62 = vpop.permute.xlu0 %61
    %v64 = vperm.slane %v59, 0
    %v65 = vmul.f32 %v62, %v64
    %v66 = vadd.f32 %v58, %v65
    %v67 = vld [vmem:[#allocation5 + $0x3] sm:$0x1]
    %68 = vset.pattern.permute.xlu0 3
    %69 = vperm.xlu0 %68, %v42
    %v70 = vpop.permute.xlu0 %69
    %v72 = vperm.slane %v67, 0
    %v73 = vmul.f32 %v70, %v72
    %v74 = vadd.f32 %v66, %v73
    %v75 = vld [vmem:[#allocation5 + $0x4] sm:$0x1]
    %v76 = vperm.slane %v75, 0
    %v77 = vadd.f32 %v74, %v76
    %v78 = vand.u32 2147483647, %v77
    %vm79 = vcmp.le.f32.partialorder %v78, 0.7853982
    %vm80 = vcmp.lt.s32.totalorder %v77, 0
    %v81 = vand.u32 %v77, 2139095040
    %v82 = vshrl.u32 %v81, 23
    %v83 = vsub.s32 %v82, 127
    %v84 = vand.u32 2147483647, %v77
    %v85 = vand.u32 %v84, 8388607
    %v86 = vor.u32 %v85, 8388608
    %v87 = vsub.s32 0, %v86
    %v88 = vadd.s32 %v83, 1
    %vm89 = vcmp.gt.s32.totalorder %v88, 0
    %v90 = vsel %vm89, %v88, 0
    %v91 = vshrl.u32 %v90, 5
    %v92 = vand.u32 %v90, 31
    %v93 = vsub.s32 32, %v92
    %v94 = vshrl.u32 683565275, %v93
    %v95 = vshll.u32 683565275, %v92
    %v96 = vshrl.u32 2475754826, %v93
    %v97 = vor.u32 %v95, %v96
    %v98 = vshll.u32 2475754826, %v92
    %v99 = vshrl.u32 2131351028, %v93
    %v100 = vor.u32 %v98, %v99
    %v101 = vshll.u32 2131351028, %v92
    %v102 = vshrl.u32 2102212464, %v93
    %v103 = vor.u32 %v101, %v102
    %v104 = vshll.u32 2102212464, %v92
    %v105 = vshrl.u32 920167782, %v93
    %v106 = vor.u32 %v104, %v105
    %v107 = vshll.u32 920167782, %v92
    %v108 = vshrl.u32 1326507024, %v93
    %v109 = vor.u32 %v107, %v108
    %vm110 = vcmp.lt.s32.totalorder %v91, 1
    %vm111 = vcmp.lt.s32.totalorder %v91, 2
    %vm112 = vcmp.lt.s32.totalorder %v91, 3
    %vm113 = vcmp.lt.s32.totalorder %v91, 4
    %v114 = vsel %vm110, %v94, %v97
    %v115 = vsel %vm113, %v103, 2102212464
    %v116 = vsel %vm112, %v100, %v115
    %v117 = vsel %vm111, %v114, %v116
    %v118 = vsel %vm110, %v97, %v100
    %v119 = vsel %vm113, %v106, 920167782
    %v120 = vsel %vm112, %v103, %v119
    %v121 = vsel %vm111, %v118, %v120
    %v122 = vsel %vm110, %v100, %v103
    %v123 = vsel %vm113, %v109, 1326507024
    %v124 = vsel %vm112, %v106, %v123
    %v125 = vsel %vm111, %v122, %v124
    %v126 = vshll.u32 %v86, 8
    %v127 = vand.u32 %v126, 65535
    %v128 = vshrl.u32 %v126, 16
    %v129 = vand.u32 %v125, 65535
    %v130 = vshrl.u32 %v125, 16
    %v131 = vmul.u32 %v127, %v129
    %v132 = vmul.u32 %v127, %v130
    %v133 = vmul.u32 %v128, %v129
    %v134 = vmul.u32 %v128, %v130
    %v135 = vshll.u32 %v132, 16
    %v136 = vshrl.u32 %v132, 16
    %v137 = vshll.u32 %v133, 16
    %v138 = vshrl.u32 %v133, 16
    %vm139 = vc.u32 %v131, %v135
    %v140 = vsel %vm139, 1, 0
    %v141 = vadd.s32 %v131, %v135
    %v142 = vadd.s32 %v134, %v140
    %vm143 = vc.u32 %v141, %v137
    %v144 = vsel %vm143, 1, 0
    %v145 = vadd.s32 %v141, %v137
    %v146 = vadd.s32 %v142, %v144
    %v147 = vadd.s32 %v146, %v136
    %v148 = vadd.s32 %v147, %v138
    %v149 = vand.u32 %v126, 65535
    %v150 = vshrl.u32 %v126, 16
    %v151 = vand.u32 %v121, 65535
    %v152 = vshrl.u32 %v121, 16
    %v153 = vmul.u32 %v149, %v151
    %v154 = vmul.u32 %v149, %v152
    %v155 = vmul.u32 %v150, %v151
    %v156 = vmul.u32 %v150, %v152
    %v157 = vshll.u32 %v154, 16
    %v158 = vshrl.u32 %v154, 16
    %v159 = vshll.u32 %v155, 16
    %v160 = vshrl.u32 %v155, 16
    %vm161 = vc.u32 %v153, %v157
    %v162 = vsel %vm161, 1, 0
    %v163 = vadd.s32 %v153, %v157
    %v164 = vadd.s32 %v156, %v162
    %vm165 = vc.u32 %v163, %v159
    %v166 = vsel %vm165, 1, 0
    %v167 = vadd.s32 %v163, %v159
    %v168 = vadd.s32 %v164, %v166
    %v169 = vadd.s32 %v168, %v158
    %v170 = vadd.s32 %v169, %v160
    %v171 = vmul.u32 %v126, %v117
    %v172 = vadd.s32 %v148, %v167
    %vm173 = vc.u32 %v148, %v167
    %v174 = vadd.s32 %v170, 1
    %v175 = vsel %vm173, %v174, %v170
    %v176 = vadd.s32 %v171, %v175
    %v177 = vadd.s32 %v176, 536870912
    %v178 = vshrl.u32 %v177, 30
    %v179 = vshll.u32 %v178, 30
    %v180 = vsub.s32 %v176, %v179
    %vm181 = vcmp.lt.s32.totalorder %v180, 0
    %v182 = vsub.s32 0, %v180
    %v183 = vsel %vm181, %v182, %v180
    %v184 = vclz %v183
    %v185 = vsub.s32 %v184, 2
    %vm186 = vcmp.gt.s32.totalorder 0, %v185
    %v187 = vsel %vm186, 0, %v185
    %v188 = vsub.s32 32, %v187
    %v189 = vshll.u32 %v180, %v187
    %v190 = vshrl.u32 %v172, %v188
    %v191 = vor.u32 %v189, %v190
    %v192 = vsub.s32 4294967266, %v187
    %v193 = vadd.s32 %v192, 127
    %v194 = vshll.u32 %v193, 23
    %v195 = vor.u32 4788187, %v194
    %v196 = vand.u32 2147483647, %v195
    %v198 = vcvt.s32.f32 %v191
    %v199 = vmul.f32 %v198, %v196
    %v200 = vxor.u32 %v199, 2147483648
    %v201 = vsel %vm80, %v200, %v199
    %v202 = vsub.s32 4, %v178
    %v203 = vsel %vm80, %v202, %v178
    %v204 = vsel %vm79, %v77, %v201
    %v205 = vsel %vm79, 0, %v203
    %v206 = vmul.f32 %v204, %v204
    %v207 = vmul.f32 %v206, -0.001358992
    %v208 = vadd.f32 %v207, 0.041655596
    %v209 = vmul.f32 %v206, %v208
    %v210 = vadd.f32 %v209, -0.4999988
    %v211 = vmul.f32 %v206, %v210
    %v212 = vadd.f32 1.0, %v211
    %v213 = vmul.f32 %v204, %v204
    %v214 = vmul.f32 %v213, -0.00019511016
    %v215 = vadd.f32 %v214, 0.008332121
    %v216 = vmul.f32 %v213, %v215
    %v217 = vadd.f32 %v216, -0.16666654
    %v218 = vmul.f32 %v213, %v217
    %v219 = vadd.f32 %v218, 1.0
    %v220 = vmul.f32 %v219, %v204
    %vm221 = vweird.f32 %v77
    %v222 = vadd.s32 %v205, 3
    %v223 = vand.u32 %v222, 3
    %vm224 = vcmp.lt.s32.totalorder %v223, 2
    %vm225 = vcmp.eq.s32.totalorder %v223, 0
    %v226 = vxor.u32 %v220, 2147483648
    %v227 = vsel %vm225, %v212, %v226
    %vm228 = vcmp.eq.s32.totalorder %v223, 2
    %v229 = vxor.u32 %v212, 2147483648
    %v230 = vsel %vm228, %v229, %v220
    %v231 = vsel %vm224, %v227, %v230
    %v232 = vsel %vm221, nan, %v231
    %233 = vst [vmem:[#allocation7] sm:$0xff] %v232
    // Predicated region
    $region18: #{tpu_custom_call.1} parent=1 // pred_check
      _
    $region19: #{tpu_custom_call.1} parent=1 // pred_check_branch
      %235 = sbr.rel (0) target = $region21
    $region20: #{tpu_custom_call.1} parent=1 // pred_region
      %237 = vsyncadd [#allocation4], 96
      %s238 = sshll.u32 [#allocation7], 4
      %s239 = int_to_ptr.vmem [resolvable:$true] %s238
      %s240 = sshll.u32 %s2, 4
      %s241 = int_to_ptr.hbm [resolvable:$true] %s240
      %246 = dma.vmem_to_hbm [thread:$0]  %s239, 32, %s241, [#allocation4], 32, 32, 2
    $region21: #{tpu_custom_call.1} parent=1 // pred_fallthru
      _
    // Predicated region
    $region22: #{tpu_custom_call.1} parent=1 // pred_check
      _
    $region23: #{tpu_custom_call.1} parent=1 // pred_check_branch
      %248 = sbr.rel (0) target = $region25
    $region24: #{tpu_custom_call.1} parent=1 // pred_region
      %250 = dma.done [#allocation4], 128
    $region25: #{tpu_custom_call.1} parent=1 // pred_fallthru
      _
    %251 = vsyncpa [#allocation3], 1
    %252 = vsyncpa [#allocation6], 1
    %253 = vsyncpa [#allocation4], 1

</llo_original>
